<compile_context>
chip_gen: v6e
topology: v6e:2x2x1
jax: 0.10.0
libtpu: 0.0.40
codegen_flags: <defaults>
</compile_context>

<pallas_src>
import jax
import jax.numpy as jnp
from jax.experimental import pallas as pl
from jax.experimental.pallas import tpu as pltpu

LANES = 128
MAX_BLOCK_ROWS = 1024  # 1024*128*4B = 512 KiB per buffer (x2 for double-buf)


def mlp_kernel(p_ref, x_ref, o_ref):
    # p_ref (SMEM, f32[10]): [w1_0,w1_1,w1_2, b1_0,b1_1,b1_2, w2_0,w2_1,w2_2, b2]
    # x_ref / o_ref: (block_rows, 128) f32 lane-dense slabs.
    x = x_ref[...]
    acc = jnp.full_like(x, p_ref[9])          # start from b2 (scalar broadcast)
    # Unrolled over the 3 hidden units: pure VPU mul/add + EUP sigmoid.
    for k in range(3):
        h = jax.nn.sigmoid(x * p_ref[k] + p_ref[3 + k])
        acc = acc + p_ref[6 + k] * h
    o_ref[...] = acc


def model_forward(x, w1, b1, w2, b2):
    """Forward pass of the 1->3->1 MLP.

    x:  (N, 1) float32
    w1: (3, 1) float32   (torch fc1.weight layout)
    b1: (3,)   float32
    w2: (1, 3) float32   (torch fc2.weight layout)
    b2: (1,)   float32
    Returns (N, 1) float32.
    """
    n = x.shape[0]

    # Pack the 10 parameter scalars into one SMEM-resident vector.
    params = jnp.concatenate(
        [w1.reshape(-1), b1.reshape(-1), w2.reshape(-1), b2.reshape(-1)]
    ).astype(jnp.float32)

    # Lane-dense view: flatten, pad to a whole number of (block_rows, 128)
    # tiles, reshape to (rows, 128).
    flat = x.reshape(-1).astype(jnp.float32)
    rows = max(pl.cdiv(n, LANES), 1)
    rows = ((rows + 7) // 8) * 8                      # sublane (8) alignment
    block_rows = min(MAX_BLOCK_ROWS, rows)
    rows = ((rows + block_rows - 1) // block_rows) * block_rows
    total = rows * LANES
    flat = jnp.pad(flat, (0, total - n))
    x2d = flat.reshape(rows, LANES)

    grid = (rows // block_rows,)

    out2d = pl.pallas_call(
        mlp_kernel,
        out_shape=jax.ShapeDtypeStruct((rows, LANES), jnp.float32),
        grid=grid,
        in_specs=[
            pl.BlockSpec(memory_space=pltpu.MemorySpace.SMEM),     # params
            pl.BlockSpec((block_rows, LANES), lambda i: (i, 0)),   # x slab
        ],
        out_specs=pl.BlockSpec((block_rows, LANES), lambda i: (i, 0)),
        compiler_params=pltpu.CompilerParams(
            dimension_semantics=("parallel",),
        ),
    )(params, x2d)

    # Trim the padded tail and restore the (N, 1) feature layout.
    return out2d.reshape(-1)[:n].reshape(n, 1)


def init_params(key):
    """Deterministic init matching PyTorch nn.Linear defaults:
    weight ~ U(-1/sqrt(fan_in), 1/sqrt(fan_in)),
    bias   ~ U(-1/sqrt(fan_in), 1/sqrt(fan_in)).
    Shapes follow torch convention: weight (out, in), bias (out,)."""
    k1, k2, k3, k4 = jax.random.split(key, 4)
    bound1 = 1.0  # fan_in = 1
    w1 = jax.random.uniform(k1, (3, 1), jnp.float32, -bound1, bound1)
    b1 = jax.random.uniform(k2, (3,), jnp.float32, -bound1, bound1)
    bound2 = 1.0 / (3.0 ** 0.5)  # fan_in = 3
    w2 = jax.random.uniform(k3, (1, 3), jnp.float32, -bound2, bound2)
    b2 = jax.random.uniform(k4, (1,), jnp.float32, -bound2, bound2)
    return w1, b1, w2, b2


if __name__ == "__main__":
    key = jax.random.PRNGKey(0)
    kx, kp = jax.random.split(key)

    # Small batch of scalar inputs, consistent with Linear(1, 3) input dim.
    x = jax.random.uniform(kx, (8, 1), jnp.float32)

    w1, b1, w2, b2 = init_params(kp)

    y = model_forward(x, w1, b1, w2, b2)
    jax.block_until_ready(y)

    # Pure-JAX reference of the same forward pass (torch weight layout).
    ref = jax.nn.sigmoid(x @ w1.T + b1) @ w2.T + b2
    assert y.shape == (x.shape[0], 1)
    assert jnp.allclose(y, ref, atol=1e-5), "mismatch vs reference"

    print("KERNEL_OK")
</pallas_src>

<mosaic_0001>
module attributes {stable_mosaic.version = 11 : i64} {
  func.func @mlp_kernel(%arg0: i32, %arg1: memref<10xf32, #tpu.memory_space<smem>>, %arg2: memref<8x128xf32, #tpu.memory_space<vmem>>, %arg3: memref<8x128xf32, #tpu.memory_space<vmem>>) attributes {dimension_semantics = [#tpu.dimension_semantics<parallel>], iteration_bounds = array<i64: 1>, scalar_prefetch = 0 : i64, scratch_operands = 0 : i64, tpu.core_type = #tpu.core_type<tc>, window_params = [{transform_indices = @transform_0, window_bounds = array<i64: 10>}, {transform_indices = @transform_1, window_bounds = array<i64: 8, 128>}, {transform_indices = @transform_2, window_bounds = array<i64: 8, 128>}]} {
    %c0 = arith.constant 0 : index
    %c0_0 = arith.constant 0 : index
    %0 = vector.load %arg2[%c0, %c0_0] : memref<8x128xf32, #tpu.memory_space<vmem>>, vector<8x128xf32>
    %c9 = arith.constant 9 : index
    %1 = memref.load %arg1[%c9] : memref<10xf32, #tpu.memory_space<smem>>
    %2 = vector.broadcast %1 : f32 to vector<8x128xf32>
    %c0_1 = arith.constant 0 : index
    %3 = memref.load %arg1[%c0_1] : memref<10xf32, #tpu.memory_space<smem>>
    %4 = vector.broadcast %3 : f32 to vector<8x128xf32>
    %5 = arith.mulf %0, %4 : vector<8x128xf32>
    %c3 = arith.constant 3 : index
    %6 = memref.load %arg1[%c3] : memref<10xf32, #tpu.memory_space<smem>>
    %7 = vector.broadcast %6 : f32 to vector<8x128xf32>
    %8 = arith.addf %5, %7 : vector<8x128xf32>
    %9 = arith.negf %8 : vector<8x128xf32>
    %10 = math.exp %9 : vector<8x128xf32>
    %cst = arith.constant 1.000000e+00 : f32
    %11 = vector.broadcast %cst : f32 to vector<8x128xf32>
    %12 = arith.addf %11, %10 : vector<8x128xf32>
    %13 = arith.divf %11, %12 : vector<8x128xf32>
    %c6 = arith.constant 6 : index
    %14 = memref.load %arg1[%c6] : memref<10xf32, #tpu.memory_space<smem>>
    %15 = vector.broadcast %14 : f32 to vector<8x128xf32>
    %16 = arith.mulf %15, %13 : vector<8x128xf32>
    %17 = arith.addf %2, %16 : vector<8x128xf32>
    %c1 = arith.constant 1 : index
    %18 = memref.load %arg1[%c1] : memref<10xf32, #tpu.memory_space<smem>>
    %19 = vector.broadcast %18 : f32 to vector<8x128xf32>
    %20 = arith.mulf %0, %19 : vector<8x128xf32>
    %c4 = arith.constant 4 : index
    %21 = memref.load %arg1[%c4] : memref<10xf32, #tpu.memory_space<smem>>
    %22 = vector.broadcast %21 : f32 to vector<8x128xf32>
    %23 = arith.addf %20, %22 : vector<8x128xf32>
    %24 = arith.negf %23 : vector<8x128xf32>
    %25 = math.exp %24 : vector<8x128xf32>
    %cst_2 = arith.constant 1.000000e+00 : f32
    %26 = vector.broadcast %cst_2 : f32 to vector<8x128xf32>
    %27 = arith.addf %26, %25 : vector<8x128xf32>
    %28 = arith.divf %26, %27 : vector<8x128xf32>
    %c7 = arith.constant 7 : index
    %29 = memref.load %arg1[%c7] : memref<10xf32, #tpu.memory_space<smem>>
    %30 = vector.broadcast %29 : f32 to vector<8x128xf32>
    %31 = arith.mulf %30, %28 : vector<8x128xf32>
    %32 = arith.addf %17, %31 : vector<8x128xf32>
    %c2 = arith.constant 2 : index
    %33 = memref.load %arg1[%c2] : memref<10xf32, #tpu.memory_space<smem>>
    %34 = vector.broadcast %33 : f32 to vector<8x128xf32>
    %35 = arith.mulf %0, %34 : vector<8x128xf32>
    %c5 = arith.constant 5 : index
    %36 = memref.load %arg1[%c5] : memref<10xf32, #tpu.memory_space<smem>>
    %37 = vector.broadcast %36 : f32 to vector<8x128xf32>
    %38 = arith.addf %35, %37 : vector<8x128xf32>
    %39 = arith.negf %38 : vector<8x128xf32>
    %40 = math.exp %39 : vector<8x128xf32>
    %cst_3 = arith.constant 1.000000e+00 : f32
    %41 = vector.broadcast %cst_3 : f32 to vector<8x128xf32>
    %42 = arith.addf %41, %40 : vector<8x128xf32>
    %43 = arith.divf %41, %42 : vector<8x128xf32>
    %c8 = arith.constant 8 : index
    %44 = memref.load %arg1[%c8] : memref<10xf32, #tpu.memory_space<smem>>
    %45 = vector.broadcast %44 : f32 to vector<8x128xf32>
    %46 = arith.mulf %45, %43 : vector<8x128xf32>
    %47 = arith.addf %32, %46 : vector<8x128xf32>
    %c0_4 = arith.constant 0 : index
    %c0_5 = arith.constant 0 : index
    %48 = vector.load %arg3[%c0_4, %c0_5] : memref<8x128xf32, #tpu.memory_space<vmem>>, vector<8x128xf32>
    tpu.vector_store %arg3[%c0_4, %c0_5], %47 {strides = array<i32>} : memref<8x128xf32, #tpu.memory_space<vmem>>, vector<8x128xf32>,
    return
  }
  func.func @transform_0(%arg0: i32) -> i32 {
    %c0_i32 = arith.constant 0 : i32
    %c0_i32_0 = arith.constant 0 : i32
    return %c0_i32 : i32
  }
  func.func @transform_1(%arg0: i32) -> (i32, i32) {
    %c0_i32 = arith.constant 0 : i32
    %c0_i32_0 = arith.constant 0 : i32
    return %arg0, %c0_i32 : i32, i32
  }
  func.func @transform_2(%arg0: i32) -> (i32, i32) {
    %c0_i32 = arith.constant 0 : i32
    %c0_i32_0 = arith.constant 0 : i32
    return %arg0, %c0_i32 : i32, i32
  }
}

</mosaic_0001>

<llo_original>
// kernel: tpu_custom_call.1
$region0: #{tpu_custom_call.1}
  #allocation0 [shape = 'u32[]', space=smem, size = 0x4, offset = 0x4, fixed_abs, tag = 'smem constant byte address 0x4 - core index']
  #allocation1 [shape = 'u32[144,128]{1,0:T(1,128)}', space=vmem, size = 0x12000, scoped, tag = 'internal scratch']
  %s0 = inlined_call_operand.hbm [shape: f32[10], index: 0, kind: input, shape index: {}]
  %s1 = inlined_call_operand.hbm [shape: f32[8,128], index: 1, kind: input, shape index: {}]
  %s2 = inlined_call_operand.hbm [shape: f32[8,128], index: 2, kind: output, shape index: {}]
  %s3 = sld [smem:[#allocation0]]
  $region26: #{tpu_custom_call.1} parent=0
    _
  %s5 = ssub.s32 1, %s3
  %s6 = scalar_select 0, %s5, %s3
  $region1: #{tpu_custom_call.1} parent=0
    #allocation2 [shape = 'u8[512]{0}', space=smem, size = 0x200, scoped, tag = 'input window, operand 0, single buffered']
    #allocation3 [shape = 's32[1]{0}', space=sflag, size = 0x4, scoped, tag = 'scoped memory for tpu_custom_call.1']
    #allocation4 [shape = 's32[1]{0}', space=sflag, size = 0x4, scoped, tag = 'scoped memory for tpu_custom_call.1']
    #allocation5 [shape = 's32[1]{0}', space=sflag, size = 0x4, scoped, tag = 'scoped memory for tpu_custom_call.1']
    #allocation6 [shape = 'u8[4096]{0}', space=vmem, size = 0x1000, scoped, tag = 'input window, operand 1, single buffered']
    #allocation7 [shape = 'u8[4096]{0}', space=vmem, size = 0x1000, scoped, tag = 'output window, operand 0, single buffered']
    %7 = vsyncpa [#allocation5], 0
    %8 = vsyncpa [#allocation3], 0
    %9 = vsyncpa [#allocation4], 0
    // Predicated region
    $region2: #{tpu_custom_call.1} parent=1 // pred_check
      _
    $region3: #{tpu_custom_call.1} parent=1 // pred_check_branch
      %11 = sbr.rel (0) target = $region5
    $region4: #{tpu_custom_call.1} parent=1 // pred_region
      %s13 = ssub.s32 16, 16
      %14 = vsyncadd [#allocation5], %s13
      %17 = dma.hbm_to_smem %s0, 16, [#allocation2], [#allocation5]
    $region5: #{tpu_custom_call.1} parent=1 // pred_fallthru
      _
    // Predicated region
    $region6: #{tpu_custom_call.1} parent=1 // pred_check
      _
    $region7: #{tpu_custom_call.1} parent=1 // pred_check_branch
      %19 = sbr.rel (0) target = $region9
    $region8: #{tpu_custom_call.1} parent=1 // pred_region
      %s21 = ssub.s32 128, 128
      %22 = vsyncadd [#allocation3], %s21
      %s24 = sshll.u32 [#allocation6], 4
      %s25 = int_to_ptr.vmem [resolvable:$true] %s24
      %27 = dma.hbm_to_vmem [thread:$0]  %s1, 128, %s25, [#allocation3]
    $region9: #{tpu_custom_call.1} parent=1 // pred_fallthru
      _
    // Predicated region
    $region10: #{tpu_custom_call.1} parent=1 // pred_check
      _
    $region11: #{tpu_custom_call.1} parent=1 // pred_check_branch
      %29 = sbr.rel (0) target = $region13
    $region12: #{tpu_custom_call.1} parent=1 // pred_region
      %30 = dma.done [#allocation5], 16
    $region13: #{tpu_custom_call.1} parent=1 // pred_fallthru
      _
    // Predicated region
    $region14: #{tpu_custom_call.1} parent=1 // pred_check
      _
    $region15: #{tpu_custom_call.1} parent=1 // pred_check_branch
      %32 = sbr.rel (0) target = $region17
    $region16: #{tpu_custom_call.1} parent=1 // pred_region
      %33 = dma.done [#allocation3], 128
    $region17: #{tpu_custom_call.1} parent=1 // pred_fallthru
      _
    %34 = sfence
    %v35 = vld [vmem:[#allocation6] sm:$0xff]
    %s36 = sld [smem:[#allocation2 + $0x9]]
    %v37 = vstv %s36
    %s38 = sld [smem:[#allocation2]]
    %v39 = vstv %s38
    %v40 = vmul.f32 %v35, %v39
    %s41 = sld [smem:[#allocation2 + $0x3]]
    %v42 = vstv %s41
    %v43 = vadd.f32 %v40, %v42
    %v44 = vxor.u32 %v43, 2147483648
    %v45 = vmul.f32 %v44, 1.442695
    %v46 = vpow.pop %v45
    %v47 = vadd.f32 %v46, 1.0
    %v48 = vrcp.pop %v47
    %v49 = vmul.f32 1.0, %v48
    %s50 = sld [smem:[#allocation2 + $0x6]]
    %v51 = vstv %s50
    %v52 = vmul.f32 %v51, %v49
    %v53 = vadd.f32 %v37, %v52
    %s54 = sld [smem:[#allocation2 + $0x1]]
    %v55 = vstv %s54
    %v56 = vmul.f32 %v35, %v55
    %s57 = sld [smem:[#allocation2 + $0x4]]
    %v58 = vstv %s57
    %v59 = vadd.f32 %v56, %v58
    %v60 = vxor.u32 %v59, 2147483648
    %v61 = vmul.f32 %v60, 1.442695
    %v62 = vpow.pop %v61
    %v63 = vadd.f32 %v62, 1.0
    %v64 = vrcp.pop %v63
    %v65 = vmul.f32 1.0, %v64
    %s66 = sld [smem:[#allocation2 + $0x7]]
    %v67 = vstv %s66
    %v68 = vmul.f32 %v67, %v65
    %v69 = vadd.f32 %v53, %v68
    %s70 = sld [smem:[#allocation2 + $0x2]]
    %v71 = vstv %s70
    %v72 = vmul.f32 %v35, %v71
    %s73 = sld [smem:[#allocation2 + $0x5]]
    %v74 = vstv %s73
    %v75 = vadd.f32 %v72, %v74
    %v76 = vxor.u32 %v75, 2147483648
    %v77 = vmul.f32 %v76, 1.442695
    %v78 = vpow.pop %v77
    %v79 = vadd.f32 %v78, 1.0
    %v80 = vrcp.pop %v79
    %v81 = vmul.f32 1.0, %v80
    %s82 = sld [smem:[#allocation2 + $0x8]]
    %v83 = vstv %s82
    %v84 = vmul.f32 %v83, %v81
    %v85 = vadd.f32 %v69, %v84
    %86 = vst [vmem:[#allocation7] sm:$0xff] %v85
    // Predicated region
    $region18: #{tpu_custom_call.1} parent=1 // pred_check
      _
    $region19: #{tpu_custom_call.1} parent=1 // pred_check_branch
      %88 = sbr.rel (0) target = $region21
    $region20: #{tpu_custom_call.1} parent=1 // pred_region
      %s90 = ssub.s32 128, 128
      %91 = vsyncadd [#allocation4], %s90
      %s93 = sshll.u32 [#allocation7], 4
      %s94 = int_to_ptr.vmem [resolvable:$true] %s93
      %96 = dma.vmem_to_hbm [thread:$0]  %s94, 128, %s2, [#allocation4]
    $region21: #{tpu_custom_call.1} parent=1 // pred_fallthru
      _
    // Predicated region
    $region22: #{tpu_custom_call.1} parent=1 // pred_check
      _
    $region23: #{tpu_custom_call.1} parent=1 // pred_check_branch
      %98 = sbr.rel (0) target = $region25
    $region24: #{tpu_custom_call.1} parent=1 // pred_region
      %99 = dma.done [#allocation4], 128
    $region25: #{tpu_custom_call.1} parent=1 // pred_fallthru
      _
    %100 = vsyncpa [#allocation3], 1
    %101 = vsyncpa [#allocation4], 1
    %102 = vsyncpa [#allocation5], 1

</llo_original>
